<compile_context>
chip_gen: v6e
topology: v6e:2x2x1
jax: 0.10.0
libtpu: 0.0.40
codegen_flags: <defaults>
</compile_context>

<pallas_src>
import jax
import jax.numpy as jnp
from jax.experimental import pallas as pl
from jax.experimental.pallas import tpu as pltpu

_HP = jax.lax.Precision.HIGHEST


def fused_pointwise_convs(x_nchw, w1, b1, w3, b3):
    """relu(conv3(conv1(x))) with both 1x1 (padding=1) convs fused into one pass."""
    n, cin, h, w = x_nchw.shape
    c3 = w3.shape[0]
    hp, wp = h + 4, w + 4          # final padded output spatial dims
    mp = hp * wp                   # flattened spatial axis (lane axis)

    # Algebraic fusion of the two pointwise convs (tiny matmuls, exact).
    w_fused = jnp.matmul(w3, w1, precision=_HP)                    # (C3, Cin)
    b_fused = (jnp.matmul(w3, b1, precision=_HP) + b3).reshape(c3, 1)  # inner-ring pre-relu
    ring_outer = jnp.maximum(b3, 0.0).reshape(c3, 1)               # outermost-ring value

    # Zero-pad x by 2 so interior and inner ring share one fused-FMA formula.
    x_pad = jnp.pad(x_nchw, ((0, 0), (0, 0), (2, 2), (2, 2))).reshape(n, cin, mp)

    # Outermost-ring mask (1 on the border of the (hp, wp) grid), flattened lane-dense.
    edge_mask = jnp.pad(jnp.zeros((hp - 2, wp - 2), jnp.float32),
                        ((1, 1), (1, 1)), constant_values=1.0).reshape(1, mp)

    def kernel(x_ref, w_ref, bf_ref, ro_ref, edge_ref, o_ref):
        # x_ref: (N, Cin, Mp)  w_ref: (C3, Cin)  bf/ro: (C3, 1)
        # edge_ref: (1, Mp)    o_ref: (N, C3, Mp)
        bf = bf_ref[...]                                   # (C3, 1)
        ro = ro_ref[...]                                   # (C3, 1)
        edge = edge_ref[...] > 0.5                         # (1, Mp) bool
        # Hoisted weight columns (no per-iteration re-slicing / re-broadcast emission).
        w_cols = [w_ref[:, k:k + 1] for k in range(cin)]   # (C3, 1) each
        for b in range(n):                                 # N = 2, unrolled
            x = x_ref[b]                                   # (Cin, Mp)
            y = w_cols[0] * x[0:1, :]                      # broadcast FMA on the VPU
            for k in range(1, cin):
                y = y + w_cols[k] * x[k:k + 1, :]
            y = jnp.maximum(y + bf, 0.0)                   # (C3, Mp)
            o_ref[b] = jnp.where(edge, ro, y).astype(o_ref.dtype)

    out = pl.pallas_call(
        kernel,
        out_shape=jax.ShapeDtypeStruct((n, c3, mp), jnp.float32),
        grid=(1,),                                         # single step: no pipeline overhead
        in_specs=[
            pl.BlockSpec((n, cin, mp), lambda i: (0, 0, 0)),
            pl.BlockSpec((c3, cin), lambda i: (0, 0)),
            pl.BlockSpec((c3, 1), lambda i: (0, 0)),
            pl.BlockSpec((c3, 1), lambda i: (0, 0)),
            pl.BlockSpec((1, mp), lambda i: (0, 0)),
        ],
        out_specs=pl.BlockSpec((n, c3, mp), lambda i: (0, 0, 0)),
        compiler_params=pltpu.CompilerParams(
            dimension_semantics=("arbitrary",)),
    )(x_pad, w_fused, b_fused, ring_outer, edge_mask)

    return out.reshape(n, c3, hp, wp)                      # metadata-only reshape


def init_params(key):
    k1, k2, k3, k4, k5, k6 = jax.random.split(key, 6)
    # Weights stored channel-major (Cout, Cin) == PyTorch Conv2d weight[:, :, 0, 0].
    w1 = jax.random.normal(k1, (16, 3), jnp.float32) * (1.0 / jnp.sqrt(3.0))
    b1 = jax.random.normal(k2, (16,), jnp.float32) * 0.01
    # conv2 (16 -> 32) exists in the module but v2/v3/v4 are dead code in forward.
    w2 = jax.random.normal(k3, (32, 16), jnp.float32) * 0.25
    b2 = jax.random.normal(k4, (32,), jnp.float32) * 0.01
    # TODO(synk): original module declares conv3 as Conv2d(32, 64) but applies it to
    # v1 (16 channels), a shape error in PyTorch; implemented as 16 -> 64 so the
    # returned path relu(conv3(v1)) is well-defined.
    w3 = jax.random.normal(k5, (64, 16), jnp.float32) * 0.25
    b3 = jax.random.normal(k6, (64,), jnp.float32) * 0.01
    return dict(w1=w1, b1=b1, w2=w2, b2=b2, w3=w3, b3=b3)


@jax.jit
def model_forward(x_nchw, params):
    # NCHW in, NCHW out (matches PyTorch output convention).
    return fused_pointwise_convs(x_nchw, params["w1"], params["b1"],
                                 params["w3"], params["b3"])


def reference_forward(x_nchw, params):
    """Pure-JAX reference with the same padding semantics (sanity check)."""
    xp = jnp.pad(x_nchw, ((0, 0), (0, 0), (1, 1), (1, 1)))
    v1 = jnp.einsum("oc,nchw->nohw", params["w1"], xp, precision=_HP)
    v1 = v1 + params["b1"][None, :, None, None]
    v1p = jnp.pad(v1, ((0, 0), (0, 0), (1, 1), (1, 1)))
    v5 = jnp.einsum("oc,nchw->nohw", params["w3"], v1p, precision=_HP)
    v5 = v5 + params["b3"][None, :, None, None]
    return jnp.maximum(v5, 0.0)


if __name__ == "__main__":
    key = jax.random.PRNGKey(0)
    pkey, xkey = jax.random.split(key)
    params = init_params(pkey)

    # Small shapes consistent with the module: batch=2, 3 channels, 16x16 spatial.
    x1 = jax.random.normal(xkey, (2, 3, 16, 16), jnp.float32)

    out = model_forward(x1, params)
    jax.block_until_ready(out)
    assert out.shape == (2, 64, 20, 20), out.shape

    ref = reference_forward(x1, params)
    assert jnp.allclose(out, ref, atol=1e-3, rtol=1e-3), float(
        jnp.max(jnp.abs(out - ref)))

    print("KERNEL_OK")
</pallas_src>

<mosaic_0001>
module attributes {stable_mosaic.version = 11 : i64} {
  func.func @kernel(%arg0: i32, %arg1: memref<2x3x400xf32, #tpu.memory_space<vmem>>, %arg2: memref<64x3xf32, #tpu.memory_space<vmem>>, %arg3: memref<64x1xf32, #tpu.memory_space<vmem>>, %arg4: memref<64x1xf32, #tpu.memory_space<vmem>>, %arg5: memref<1x400xf32, #tpu.memory_space<vmem>>, %arg6: memref<2x64x400xf32, #tpu.memory_space<vmem>>) attributes {dimension_semantics = [#tpu.dimension_semantics<arbitrary>], iteration_bounds = array<i64: 1>, scalar_prefetch = 0 : i64, scratch_operands = 0 : i64, tpu.core_type = #tpu.core_type<tc>, window_params = [{pipeline_mode = #tpu.pipeline_mode<synchronous>, transform_indices = @transform_0, window_bounds = array<i64: 2, 3, 400>}, {pipeline_mode = #tpu.pipeline_mode<synchronous>, transform_indices = @transform_1, window_bounds = array<i64: 64, 3>}, {pipeline_mode = #tpu.pipeline_mode<synchronous>, transform_indices = @transform_2, window_bounds = array<i64: 64, 1>}, {pipeline_mode = #tpu.pipeline_mode<synchronous>, transform_indices = @transform_3, window_bounds = array<i64: 64, 1>}, {pipeline_mode = #tpu.pipeline_mode<synchronous>, transform_indices = @transform_4, window_bounds = array<i64: 1, 400>}, {pipeline_mode = #tpu.pipeline_mode<synchronous>, transform_indices = @transform_5, window_bounds = array<i64: 2, 64, 400>}]} {
    %c0 = arith.constant 0 : index
    %c0_0 = arith.constant 0 : index
    %0 = vector.load %arg3[%c0, %c0_0] : memref<64x1xf32, #tpu.memory_space<vmem>>, vector<64x1xf32>
    %c0_1 = arith.constant 0 : index
    %c0_2 = arith.constant 0 : index
    %1 = vector.load %arg4[%c0_1, %c0_2] : memref<64x1xf32, #tpu.memory_space<vmem>>, vector<64x1xf32>
    %c0_3 = arith.constant 0 : index
    %c0_4 = arith.constant 0 : index
    %2 = vector.load %arg5[%c0_3, %c0_4] : memref<1x400xf32, #tpu.memory_space<vmem>>, vector<1x400xf32>
    %cst = arith.constant 5.000000e-01 : f32
    %3 = vector.broadcast %cst : f32 to vector<1x400xf32>
    %4 = arith.cmpf ogt, %2, %3 : vector<1x400xf32>
    %c0_5 = arith.constant 0 : index
    %c0_6 = arith.constant 0 : index
    %5 = vector.load %arg2[%c0_5, %c0_6] : memref<64x3xf32, #tpu.memory_space<vmem>>, vector<64x1xf32>
    %c0_7 = arith.constant 0 : index
    %c1 = arith.constant 1 : index
    %6 = vector.load %arg2[%c0_7, %c1] : memref<64x3xf32, #tpu.memory_space<vmem>>, vector<64x1xf32>
    %c0_8 = arith.constant 0 : index
    %c2 = arith.constant 2 : index
    %7 = vector.load %arg2[%c0_8, %c2] : memref<64x3xf32, #tpu.memory_space<vmem>>, vector<64x1xf32>
    %c0_9 = arith.constant 0 : index
    %c0_10 = arith.constant 0 : index
    %c0_11 = arith.constant 0 : index
    %8 = vector.load %arg1[%c0_9, %c0_10, %c0_11] : memref<2x3x400xf32, #tpu.memory_space<vmem>>, vector<1x3x400xf32>
    %9 = vector.shape_cast %8 : vector<1x3x400xf32> to vector<3x400xf32>
    %10 = vector.extract_strided_slice %9 {offsets = [0, 0], sizes = [1, 400], strides = [1, 1]} : vector<3x400xf32> to vector<1x400xf32>
    %11 = vector.broadcast %5 : vector<64x1xf32> to vector<64x400xf32>
    %12 = vector.broadcast %10 : vector<1x400xf32> to vector<64x400xf32>
    %13 = arith.mulf %11, %12 : vector<64x400xf32>
    %14 = vector.extract_strided_slice %9 {offsets = [1, 0], sizes = [1, 400], strides = [1, 1]} : vector<3x400xf32> to vector<1x400xf32>
    %15 = vector.broadcast %6 : vector<64x1xf32> to vector<64x400xf32>
    %16 = vector.broadcast %14 : vector<1x400xf32> to vector<64x400xf32>
    %17 = arith.mulf %15, %16 : vector<64x400xf32>
    %18 = arith.addf %13, %17 : vector<64x400xf32>
    %19 = vector.extract_strided_slice %9 {offsets = [2, 0], sizes = [1, 400], strides = [1, 1]} : vector<3x400xf32> to vector<1x400xf32>
    %20 = vector.broadcast %7 : vector<64x1xf32> to vector<64x400xf32>
    %21 = vector.broadcast %19 : vector<1x400xf32> to vector<64x400xf32>
    %22 = arith.mulf %20, %21 : vector<64x400xf32>
    %23 = arith.addf %18, %22 : vector<64x400xf32>
    %24 = vector.broadcast %0 : vector<64x1xf32> to vector<64x400xf32>
    %25 = arith.addf %23, %24 : vector<64x400xf32>
    %cst_12 = arith.constant 0.000000e+00 : f32
    %26 = vector.broadcast %cst_12 : f32 to vector<64x400xf32>
    %27 = arith.maximumf %25, %26 : vector<64x400xf32>
    %28 = vector.shape_cast %4 : vector<1x400xi1> to vector<1x400xi1>
    %29 = vector.broadcast %28 : vector<1x400xi1> to vector<64x400xi1>
    %30 = vector.shape_cast %1 : vector<64x1xf32> to vector<64x1xf32>
    %31 = vector.broadcast %30 : vector<64x1xf32> to vector<64x400xf32>
    %32 = arith.select %29, %31, %27 : vector<64x400xi1>, vector<64x400xf32>
    %c0_13 = arith.constant 0 : index
    %c0_14 = arith.constant 0 : index
    %c0_15 = arith.constant 0 : index
    %33 = vector.load %arg6[%c0_13, %c0_14, %c0_15] : memref<2x64x400xf32, #tpu.memory_space<vmem>>, vector<1x64x400xf32>
    %34 = vector.shape_cast %33 : vector<1x64x400xf32> to vector<64x400xf32>
    %35 = vector.shape_cast %32 : vector<64x400xf32> to vector<1x64x400xf32>
    tpu.vector_store %arg6[%c0_13, %c0_14, %c0_15], %35 {strides = array<i32>} : memref<2x64x400xf32, #tpu.memory_space<vmem>>, vector<1x64x400xf32>,
    %c1_16 = arith.constant 1 : index
    %c0_17 = arith.constant 0 : index
    %c0_18 = arith.constant 0 : index
    %36 = vector.load %arg1[%c1_16, %c0_17, %c0_18] : memref<2x3x400xf32, #tpu.memory_space<vmem>>, vector<1x3x400xf32>
    %37 = vector.shape_cast %36 : vector<1x3x400xf32> to vector<3x400xf32>
    %38 = vector.extract_strided_slice %37 {offsets = [0, 0], sizes = [1, 400], strides = [1, 1]} : vector<3x400xf32> to vector<1x400xf32>
    %39 = vector.broadcast %5 : vector<64x1xf32> to vector<64x400xf32>
    %40 = vector.broadcast %38 : vector<1x400xf32> to vector<64x400xf32>
    %41 = arith.mulf %39, %40 : vector<64x400xf32>
    %42 = vector.extract_strided_slice %37 {offsets = [1, 0], sizes = [1, 400], strides = [1, 1]} : vector<3x400xf32> to vector<1x400xf32>
    %43 = vector.broadcast %6 : vector<64x1xf32> to vector<64x400xf32>
    %44 = vector.broadcast %42 : vector<1x400xf32> to vector<64x400xf32>
    %45 = arith.mulf %43, %44 : vector<64x400xf32>
    %46 = arith.addf %41, %45 : vector<64x400xf32>
    %47 = vector.extract_strided_slice %37 {offsets = [2, 0], sizes = [1, 400], strides = [1, 1]} : vector<3x400xf32> to vector<1x400xf32>
    %48 = vector.broadcast %7 : vector<64x1xf32> to vector<64x400xf32>
    %49 = vector.broadcast %47 : vector<1x400xf32> to vector<64x400xf32>
    %50 = arith.mulf %48, %49 : vector<64x400xf32>
    %51 = arith.addf %46, %50 : vector<64x400xf32>
    %52 = vector.broadcast %0 : vector<64x1xf32> to vector<64x400xf32>
    %53 = arith.addf %51, %52 : vector<64x400xf32>
    %cst_19 = arith.constant 0.000000e+00 : f32
    %54 = vector.broadcast %cst_19 : f32 to vector<64x400xf32>
    %55 = arith.maximumf %53, %54 : vector<64x400xf32>
    %56 = vector.shape_cast %4 : vector<1x400xi1> to vector<1x400xi1>
    %57 = vector.broadcast %56 : vector<1x400xi1> to vector<64x400xi1>
    %58 = vector.shape_cast %1 : vector<64x1xf32> to vector<64x1xf32>
    %59 = vector.broadcast %58 : vector<64x1xf32> to vector<64x400xf32>
    %60 = arith.select %57, %59, %55 : vector<64x400xi1>, vector<64x400xf32>
    %c1_20 = arith.constant 1 : index
    %c0_21 = arith.constant 0 : index
    %c0_22 = arith.constant 0 : index
    %61 = vector.load %arg6[%c1_20, %c0_21, %c0_22] : memref<2x64x400xf32, #tpu.memory_space<vmem>>, vector<1x64x400xf32>
    %62 = vector.shape_cast %61 : vector<1x64x400xf32> to vector<64x400xf32>
    %63 = vector.shape_cast %60 : vector<64x400xf32> to vector<1x64x400xf32>
    tpu.vector_store %arg6[%c1_20, %c0_21, %c0_22], %63 {strides = array<i32>} : memref<2x64x400xf32, #tpu.memory_space<vmem>>, vector<1x64x400xf32>,
    return
  }
  func.func @transform_0(%arg0: i32) -> (i32, i32, i32) {
    %c0_i32 = arith.constant 0 : i32
    %c0_i32_0 = arith.constant 0 : i32
    %c0_i32_1 = arith.constant 0 : i32
    %c0_i32_2 = arith.constant 0 : i32
    return %c0_i32, %c0_i32_0, %c0_i32_1 : i32, i32, i32
  }
  func.func @transform_1(%arg0: i32) -> (i32, i32) {
    %c0_i32 = arith.constant 0 : i32
    %c0_i32_0 = arith.constant 0 : i32
    %c0_i32_1 = arith.constant 0 : i32
    return %c0_i32, %c0_i32_0 : i32, i32
  }
  func.func @transform_2(%arg0: i32) -> (i32, i32) {
    %c0_i32 = arith.constant 0 : i32
    %c0_i32_0 = arith.constant 0 : i32
    %c0_i32_1 = arith.constant 0 : i32
    return %c0_i32, %c0_i32_0 : i32, i32
  }
  func.func @transform_3(%arg0: i32) -> (i32, i32) {
    %c0_i32 = arith.constant 0 : i32
    %c0_i32_0 = arith.constant 0 : i32
    %c0_i32_1 = arith.constant 0 : i32
    return %c0_i32, %c0_i32_0 : i32, i32
  }
  func.func @transform_4(%arg0: i32) -> (i32, i32) {
    %c0_i32 = arith.constant 0 : i32
    %c0_i32_0 = arith.constant 0 : i32
    %c0_i32_1 = arith.constant 0 : i32
    return %c0_i32, %c0_i32_0 : i32, i32
  }
  func.func @transform_5(%arg0: i32) -> (i32, i32, i32) {
    %c0_i32 = arith.constant 0 : i32
    %c0_i32_0 = arith.constant 0 : i32
    %c0_i32_1 = arith.constant 0 : i32
    %c0_i32_2 = arith.constant 0 : i32
    return %c0_i32, %c0_i32_0, %c0_i32_1 : i32, i32, i32
  }
}

</mosaic_0001>

<llo_original>
// kernel: model_forward.1
$region0: #{model_forward.1}
  #allocation0 [shape = 'u32[]', space=smem, size = 0x4, offset = 0x4, fixed_abs, tag = 'smem constant byte address 0x4 - core index']
  #allocation1 [shape = 'u32[144,128]{1,0:T(1,128)}', space=vmem, size = 0x12000, scoped, tag = 'internal scratch']
  %s0 = inlined_call_operand.vmem [shape: f32[2,3,400], index: 0, kind: input, shape index: {}]
  %s1 = inlined_call_operand.vmem [shape: f32[64,3], index: 1, kind: input, shape index: {}]
  %s2 = inlined_call_operand.vmem [shape: f32[64,1], index: 2, kind: input, shape index: {}]
  %s3 = inlined_call_operand.vmem [shape: f32[64,1], index: 3, kind: input, shape index: {}]
  %s4 = inlined_call_operand.vmem [shape: f32[1,400], index: 4, kind: input, shape index: {}]
  %s5 = inlined_call_operand.vmem [shape: f32[2,64,400], index: 5, kind: output, shape index: {}]
  %s6 = sld [smem:[#allocation0]]
  $region30: #{model_forward.1} parent=0
    _
  %s8 = ssub.s32 1, %s6
  %s9 = scalar_select 0, %s8, %s6
  // Predicated region
  $region2: #{model_forward.1} parent=0 // pred_check
    _
  $region3: #{model_forward.1} parent=0 // pred_check_branch
    %11 = sbr.rel (0) target = $region5
  $region4: #{model_forward.1} parent=0 // pred_region
    _
  $region5: #{model_forward.1} parent=0 // pred_fallthru
    _
  // Predicated region
  $region6: #{model_forward.1} parent=0 // pred_check
    _
  $region7: #{model_forward.1} parent=0 // pred_check_branch
    %13 = sbr.rel (0) target = $region9
  $region8: #{model_forward.1} parent=0 // pred_region
    _
  $region9: #{model_forward.1} parent=0 // pred_fallthru
    _
  // Predicated region
  $region10: #{model_forward.1} parent=0 // pred_check
    _
  $region11: #{model_forward.1} parent=0 // pred_check_branch
    %15 = sbr.rel (0) target = $region13
  $region12: #{model_forward.1} parent=0 // pred_region
    _
  $region13: #{model_forward.1} parent=0 // pred_fallthru
    _
  // Predicated region
  $region14: #{model_forward.1} parent=0 // pred_check
    _
  $region15: #{model_forward.1} parent=0 // pred_check_branch
    %17 = sbr.rel (0) target = $region17
  $region16: #{model_forward.1} parent=0 // pred_region
    _
  $region17: #{model_forward.1} parent=0 // pred_fallthru
    _
  // Predicated region
  $region18: #{model_forward.1} parent=0 // pred_check
    _
  $region19: #{model_forward.1} parent=0 // pred_check_branch
    %19 = sbr.rel (0) target = $region21
  $region20: #{model_forward.1} parent=0 // pred_region
    _
  $region21: #{model_forward.1} parent=0 // pred_fallthru
    _
  %v20 = vld [vmem:[%s2] sm:$0xff]
  %v21 = vld [vmem:[%s2 + $0x8] sm:$0xff]
  %v22 = vld [vmem:[%s2 + $0x10] sm:$0xff]
  %v23 = vld [vmem:[%s2 + $0x18] sm:$0xff]
  %v24 = vld [vmem:[%s2 + $0x20] sm:$0xff]
  %v25 = vld [vmem:[%s2 + $0x28] sm:$0xff]
  %v26 = vld [vmem:[%s2 + $0x30] sm:$0xff]
  %v27 = vld [vmem:[%s2 + $0x38] sm:$0xff]
  %v28 = vld [vmem:[%s3] sm:$0xff]
  %v29 = vld [vmem:[%s3 + $0x8] sm:$0xff]
  %v30 = vld [vmem:[%s3 + $0x10] sm:$0xff]
  %v31 = vld [vmem:[%s3 + $0x18] sm:$0xff]
  %v32 = vld [vmem:[%s3 + $0x20] sm:$0xff]
  %v33 = vld [vmem:[%s3 + $0x28] sm:$0xff]
  %v34 = vld [vmem:[%s3 + $0x30] sm:$0xff]
  %v35 = vld [vmem:[%s3 + $0x38] sm:$0xff]
  %v36 = vld [vmem:[%s4] sm:$0xf]
  %vm37 = vcmp.gt.f32.partialorder %v36, 0.5
  %v38 = vld [vmem:[%s1] sm:$0xff]
  %v39 = vld [vmem:[%s1 + $0x8] sm:$0xff]
  %v40 = vld [vmem:[%s1 + $0x10] sm:$0xff]
  %v41 = vld [vmem:[%s1 + $0x18] sm:$0xff]
  %v42 = vld [vmem:[%s1 + $0x20] sm:$0xff]
  %v43 = vld [vmem:[%s1 + $0x28] sm:$0xff]
  %v44 = vld [vmem:[%s1 + $0x30] sm:$0xff]
  %v45 = vld [vmem:[%s1 + $0x38] sm:$0xff]
  %v46 = vld [vmem:[%s0] sm:$0x77]
  %v47 = vld [vmem:[%s0 + $0x8] sm:$0x77]
  %49 = vset.pattern.permute.xlu0 0
  %50 = vperm.xlu0 %49, %v38
  %v51 = vpop.permute.xlu0 %50
  %54 = vset.pattern.permute.xlu0 0
  %55 = vperm.xlu0 %54, %v39
  %v56 = vpop.permute.xlu0 %55
  %59 = vset.pattern.permute.xlu0 0
  %60 = vperm.xlu0 %59, %v40
  %v61 = vpop.permute.xlu0 %60
  %64 = vset.pattern.permute.xlu0 0
  %65 = vperm.xlu0 %64, %v41
  %v66 = vpop.permute.xlu0 %65
  %69 = vset.pattern.permute.xlu0 0
  %70 = vperm.xlu0 %69, %v42
  %v71 = vpop.permute.xlu0 %70
  %74 = vset.pattern.permute.xlu0 0
  %75 = vperm.xlu0 %74, %v43
  %v76 = vpop.permute.xlu0 %75
  %79 = vset.pattern.permute.xlu0 0
  %80 = vperm.xlu0 %79, %v44
  %v81 = vpop.permute.xlu0 %80
  %84 = vset.pattern.permute.xlu0 0
  %85 = vperm.xlu0 %84, %v45
  %v86 = vpop.permute.xlu0 %85
  %v90 = vlaneseq
  %v91 = vshrl.u32 %v90, 7
  %v92 = vsub.s32 0, %v91
  %v93 = vrot.slane %v46, %v92
  %v94 = vlaneseq
  %v95 = vshrl.u32 %v94, 7
  %v96 = vsub.s32 4, %v95
  %v97 = vrot.slane %v46, %v96
  %v98 = vlaneseq
  %v99 = vshrl.u32 %v98, 7
  %v100 = vsub.s32 0, %v99
  %v101 = vrot.slane %v47, %v100
  %v102 = vlaneseq
  %v103 = vshrl.u32 %v102, 7
  %v104 = vsub.s32 4, %v103
  %v105 = vrot.slane %v47, %v104
  %v110 = vlaneseq
  %v111 = vshrl.u32 %v110, 7
  %v112 = vsub.s32 0, %v111
  %v113 = vrot.slane %v93, %v112
  %v114 = vlaneseq
  %v115 = vshrl.u32 %v114, 7
  %v116 = vsub.s32 0, %v115
  %v117 = vrot.slane %v97, %v116
  %v118 = vlaneseq
  %v119 = vshrl.u32 %v118, 7
  %v120 = vsub.s32 0, %v119
  %v121 = vrot.slane %v101, %v120
  %v122 = vlaneseq
  %v123 = vshrl.u32 %v122, 7
  %v124 = vsub.s32 0, %v123
  %v125 = vrot.slane %v105, %v124
  %v126 = vmul.f32 %v51, %v113
  %v127 = vmul.f32 %v51, %v117
  %v128 = vmul.f32 %v51, %v121
  %v129 = vmul.f32 %v51, %v125
  %v130 = vmul.f32 %v56, %v113
  %v131 = vmul.f32 %v56, %v117
  %v132 = vmul.f32 %v56, %v121
  %v133 = vmul.f32 %v56, %v125
  %v134 = vmul.f32 %v61, %v113
  %v135 = vmul.f32 %v61, %v117
  %v136 = vmul.f32 %v61, %v121
  %v137 = vmul.f32 %v61, %v125
  %v138 = vmul.f32 %v66, %v113
  %v139 = vmul.f32 %v66, %v117
  %v140 = vmul.f32 %v66, %v121
  %v141 = vmul.f32 %v66, %v125
  %v142 = vmul.f32 %v71, %v113
  %v143 = vmul.f32 %v71, %v117
  %v144 = vmul.f32 %v71, %v121
  %v145 = vmul.f32 %v71, %v125
  %v146 = vmul.f32 %v76, %v113
  %v147 = vmul.f32 %v76, %v117
  %v148 = vmul.f32 %v76, %v121
  %v149 = vmul.f32 %v76, %v125
  %v150 = vmul.f32 %v81, %v113
  %v151 = vmul.f32 %v81, %v117
  %v152 = vmul.f32 %v81, %v121
  %v153 = vmul.f32 %v81, %v125
  %v154 = vmul.f32 %v86, %v113
  %v155 = vmul.f32 %v86, %v117
  %v156 = vmul.f32 %v86, %v121
  %v157 = vmul.f32 %v86, %v125
  %158 = vset.pattern.permute.xlu0 1
  %159 = vperm.xlu0 %158, %v38
  %v160 = vpop.permute.xlu0 %159
  %162 = vset.pattern.permute.xlu0 1
  %163 = vperm.xlu0 %162, %v39
  %v164 = vpop.permute.xlu0 %163
  %166 = vset.pattern.permute.xlu0 1
  %167 = vperm.xlu0 %166, %v40
  %v168 = vpop.permute.xlu0 %167
  %170 = vset.pattern.permute.xlu0 1
  %171 = vperm.xlu0 %170, %v41
  %v172 = vpop.permute.xlu0 %171
  %174 = vset.pattern.permute.xlu0 1
  %175 = vperm.xlu0 %174, %v42
  %v176 = vpop.permute.xlu0 %175
  %178 = vset.pattern.permute.xlu0 1
  %179 = vperm.xlu0 %178, %v43
  %v180 = vpop.permute.xlu0 %179
  %182 = vset.pattern.permute.xlu0 1
  %183 = vperm.xlu0 %182, %v44
  %v184 = vpop.permute.xlu0 %183
  %186 = vset.pattern.permute.xlu0 1
  %187 = vperm.xlu0 %186, %v45
  %v188 = vpop.permute.xlu0 %187
  %v190 = vlaneseq
  %v191 = vshrl.u32 %v190, 7
  %v192 = vsub.s32 1, %v191
  %v193 = vrot.slane %v46, %v192
  %v194 = vlaneseq
  %v195 = vshrl.u32 %v194, 7
  %v196 = vsub.s32 5, %v195
  %v197 = vrot.slane %v46, %v196
  %v198 = vlaneseq
  %v199 = vshrl.u32 %v198, 7
  %v200 = vsub.s32 1, %v199
  %v201 = vrot.slane %v47, %v200
  %v202 = vlaneseq
  %v203 = vshrl.u32 %v202, 7
  %v204 = vsub.s32 5, %v203
  %v205 = vrot.slane %v47, %v204
  %v210 = vlaneseq
  %v211 = vshrl.u32 %v210, 7
  %v212 = vsub.s32 1, %v211
  %v213 = vrot.slane %v193, %v212
  %v214 = vlaneseq
  %v215 = vshrl.u32 %v214, 7
  %v216 = vsub.s32 1, %v215
  %v217 = vrot.slane %v197, %v216
  %v218 = vlaneseq
  %v219 = vshrl.u32 %v218, 7
  %v220 = vsub.s32 1, %v219
  %v221 = vrot.slane %v201, %v220
  %v222 = vlaneseq
  %v223 = vshrl.u32 %v222, 7
  %v224 = vsub.s32 1, %v223
  %v225 = vrot.slane %v205, %v224
  %v226 = vmul.f32 %v160, %v213
  %v227 = vmul.f32 %v160, %v217
  %v228 = vmul.f32 %v160, %v221
  %v229 = vmul.f32 %v160, %v225
  %v230 = vmul.f32 %v164, %v213
  %v231 = vmul.f32 %v164, %v217
  %v232 = vmul.f32 %v164, %v221
  %v233 = vmul.f32 %v164, %v225
  %v234 = vmul.f32 %v168, %v213
  %v235 = vmul.f32 %v168, %v217
  %v236 = vmul.f32 %v168, %v221
  %v237 = vmul.f32 %v168, %v225
  %v238 = vmul.f32 %v172, %v213
  %v239 = vmul.f32 %v172, %v217
  %v240 = vmul.f32 %v172, %v221
  %v241 = vmul.f32 %v172, %v225
  %v242 = vmul.f32 %v176, %v213
  %v243 = vmul.f32 %v176, %v217
  %v244 = vmul.f32 %v176, %v221
  %v245 = vmul.f32 %v176, %v225
  %v246 = vmul.f32 %v180, %v213
  %v247 = vmul.f32 %v180, %v217
  %v248 = vmul.f32 %v180, %v221
  %v249 = vmul.f32 %v180, %v225
  %v250 = vmul.f32 %v184, %v213
  %v251 = vmul.f32 %v184, %v217
  %v252 = vmul.f32 %v184, %v221
  %v253 = vmul.f32 %v184, %v225
  %v254 = vmul.f32 %v188, %v213
  %v255 = vmul.f32 %v188, %v217
  %v256 = vmul.f32 %v188, %v221
  %v257 = vmul.f32 %v188, %v225
  %v258 = vadd.f32 %v126, %v226
  %v259 = vadd.f32 %v127, %v227
  %v260 = vadd.f32 %v128, %v228
  %v261 = vadd.f32 %v129, %v229
  %v262 = vadd.f32 %v130, %v230
  %v263 = vadd.f32 %v131, %v231
  %v264 = vadd.f32 %v132, %v232
  %v265 = vadd.f32 %v133, %v233
  %v266 = vadd.f32 %v134, %v234
  %v267 = vadd.f32 %v135, %v235
  %v268 = vadd.f32 %v136, %v236
  %v269 = vadd.f32 %v137, %v237
  %v270 = vadd.f32 %v138, %v238
  %v271 = vadd.f32 %v139, %v239
  %v272 = vadd.f32 %v140, %v240
  %v273 = vadd.f32 %v141, %v241
  %v274 = vadd.f32 %v142, %v242
  %v275 = vadd.f32 %v143, %v243
  %v276 = vadd.f32 %v144, %v244
  %v277 = vadd.f32 %v145, %v245
  %v278 = vadd.f32 %v146, %v246
  %v279 = vadd.f32 %v147, %v247
  %v280 = vadd.f32 %v148, %v248
  %v281 = vadd.f32 %v149, %v249
  %v282 = vadd.f32 %v150, %v250
  %v283 = vadd.f32 %v151, %v251
  %v284 = vadd.f32 %v152, %v252
  %v285 = vadd.f32 %v153, %v253
  %v286 = vadd.f32 %v154, %v254
  %v287 = vadd.f32 %v155, %v255
  %v288 = vadd.f32 %v156, %v256
  %v289 = vadd.f32 %v157, %v257
  %290 = vset.pattern.permute.xlu0 2
  %291 = vperm.xlu0 %290, %v38
  %v292 = vpop.permute.xlu0 %291
  %294 = vset.pattern.permute.xlu0 2
  %295 = vperm.xlu0 %294, %v39
  %v296 = vpop.permute.xlu0 %295
  %298 = vset.pattern.permute.xlu0 2
  %299 = vperm.xlu0 %298, %v40
  %v300 = vpop.permute.xlu0 %299
  %302 = vset.pattern.permute.xlu0 2
  %303 = vperm.xlu0 %302, %v41
  %v304 = vpop.permute.xlu0 %303
  %306 = vset.pattern.permute.xlu0 2
  %307 = vperm.xlu0 %306, %v42
  %v308 = vpop.permute.xlu0 %307
  %310 = vset.pattern.permute.xlu0 2
  %311 = vperm.xlu0 %310, %v43
  %v312 = vpop.permute.xlu0 %311
  %314 = vset.pattern.permute.xlu0 2
  %315 = vperm.xlu0 %314, %v44
  %v316 = vpop.permute.xlu0 %315
  %318 = vset.pattern.permute.xlu0 2
  %319 = vperm.xlu0 %318, %v45
  %v320 = vpop.permute.xlu0 %319
  %v322 = vlaneseq
  %v323 = vshrl.u32 %v322, 7
  %v324 = vsub.s32 2, %v323
  %v325 = vrot.slane %v46, %v324
  %v326 = vlaneseq
  %v327 = vshrl.u32 %v326, 7
  %v328 = vsub.s32 6, %v327
  %v329 = vrot.slane %v46, %v328
  %v330 = vlaneseq
  %v331 = vshrl.u32 %v330, 7
  %v332 = vsub.s32 2, %v331
  %v333 = vrot.slane %v47, %v332
  %v334 = vlaneseq
  %v335 = vshrl.u32 %v334, 7
  %v336 = vsub.s32 6, %v335
  %v337 = vrot.slane %v47, %v336
  %v342 = vlaneseq
  %v343 = vshrl.u32 %v342, 7
  %v344 = vsub.s32 2, %v343
  %v345 = vrot.slane %v325, %v344
  %v346 = vlaneseq
  %v347 = vshrl.u32 %v346, 7
  %v348 = vsub.s32 2, %v347
  %v349 = vrot.slane %v329, %v348
  %v350 = vlaneseq
  %v351 = vshrl.u32 %v350, 7
  %v352 = vsub.s32 2, %v351
  %v353 = vrot.slane %v333, %v352
  %v354 = vlaneseq
  %v355 = vshrl.u32 %v354, 7
  %v356 = vsub.s32 2, %v355
  %v357 = vrot.slane %v337, %v356
  %v358 = vmul.f32 %v292, %v345
  %v359 = vmul.f32 %v292, %v349
  %v360 = vmul.f32 %v292, %v353
  %v361 = vmul.f32 %v292, %v357
  %v362 = vmul.f32 %v296, %v345
  %v363 = vmul.f32 %v296, %v349
  %v364 = vmul.f32 %v296, %v353
  %v365 = vmul.f32 %v296, %v357
  %v366 = vmul.f32 %v300, %v345
  %v367 = vmul.f32 %v300, %v349
  %v368 = vmul.f32 %v300, %v353
  %v369 = vmul.f32 %v300, %v357
  %v370 = vmul.f32 %v304, %v345
  %v371 = vmul.f32 %v304, %v349
  %v372 = vmul.f32 %v304, %v353
  %v373 = vmul.f32 %v304, %v357
  %v374 = vmul.f32 %v308, %v345
  %v375 = vmul.f32 %v308, %v349
  %v376 = vmul.f32 %v308, %v353
  %v377 = vmul.f32 %v308, %v357
  %v378 = vmul.f32 %v312, %v345
  %v379 = vmul.f32 %v312, %v349
  %v380 = vmul.f32 %v312, %v353
  %v381 = vmul.f32 %v312, %v357
  %v382 = vmul.f32 %v316, %v345
  %v383 = vmul.f32 %v316, %v349
  %v384 = vmul.f32 %v316, %v353
  %v385 = vmul.f32 %v316, %v357
  %v386 = vmul.f32 %v320, %v345
  %v387 = vmul.f32 %v320, %v349
  %v388 = vmul.f32 %v320, %v353
  %v389 = vmul.f32 %v320, %v357
  %v390 = vadd.f32 %v258, %v358
  %v391 = vadd.f32 %v259, %v359
  %v392 = vadd.f32 %v260, %v360
  %v393 = vadd.f32 %v261, %v361
  %v394 = vadd.f32 %v262, %v362
  %v395 = vadd.f32 %v263, %v363
  %v396 = vadd.f32 %v264, %v364
  %v397 = vadd.f32 %v265, %v365
  %v398 = vadd.f32 %v266, %v366
  %v399 = vadd.f32 %v267, %v367
  %v400 = vadd.f32 %v268, %v368
  %v401 = vadd.f32 %v269, %v369
  %v402 = vadd.f32 %v270, %v370
  %v403 = vadd.f32 %v271, %v371
  %v404 = vadd.f32 %v272, %v372
  %v405 = vadd.f32 %v273, %v373
  %v406 = vadd.f32 %v274, %v374
  %v407 = vadd.f32 %v275, %v375
  %v408 = vadd.f32 %v276, %v376
  %v409 = vadd.f32 %v277, %v377
  %v410 = vadd.f32 %v278, %v378
  %v411 = vadd.f32 %v279, %v379
  %v412 = vadd.f32 %v280, %v380
  %v413 = vadd.f32 %v281, %v381
  %v414 = vadd.f32 %v282, %v382
  %v415 = vadd.f32 %v283, %v383
  %v416 = vadd.f32 %v284, %v384
  %v417 = vadd.f32 %v285, %v385
  %v418 = vadd.f32 %v286, %v386
  %v419 = vadd.f32 %v287, %v387
  %v420 = vadd.f32 %v288, %v388
  %v421 = vadd.f32 %v289, %v389
  %423 = vset.pattern.permute.xlu0 0
  %424 = vperm.xlu0 %423, %v20
  %v425 = vpop.permute.xlu0 %424
  %428 = vset.pattern.permute.xlu0 0
  %429 = vperm.xlu0 %428, %v21
  %v430 = vpop.permute.xlu0 %429
  %433 = vset.pattern.permute.xlu0 0
  %434 = vperm.xlu0 %433, %v22
  %v435 = vpop.permute.xlu0 %434
  %438 = vset.pattern.permute.xlu0 0
  %439 = vperm.xlu0 %438, %v23
  %v440 = vpop.permute.xlu0 %439
  %443 = vset.pattern.permute.xlu0 0
  %444 = vperm.xlu0 %443, %v24
  %v445 = vpop.permute.xlu0 %444
  %448 = vset.pattern.permute.xlu0 0
  %449 = vperm.xlu0 %448, %v25
  %v450 = vpop.permute.xlu0 %449
  %453 = vset.pattern.permute.xlu0 0
  %454 = vperm.xlu0 %453, %v26
  %v455 = vpop.permute.xlu0 %454
  %458 = vset.pattern.permute.xlu0 0
  %459 = vperm.xlu0 %458, %v27
  %v460 = vpop.permute.xlu0 %459
  %v462 = vadd.f32 %v390, %v425
  %v463 = vadd.f32 %v391, %v425
  %v464 = vadd.f32 %v392, %v425
  %v465 = vadd.f32 %v393, %v425
  %v466 = vadd.f32 %v394, %v430
  %v467 = vadd.f32 %v395, %v430
  %v468 = vadd.f32 %v396, %v430
  %v469 = vadd.f32 %v397, %v430
  %v470 = vadd.f32 %v398, %v435
  %v471 = vadd.f32 %v399, %v435
  %v472 = vadd.f32 %v400, %v435
  %v473 = vadd.f32 %v401, %v435
  %v474 = vadd.f32 %v402, %v440
  %v475 = vadd.f32 %v403, %v440
  %v476 = vadd.f32 %v404, %v440
  %v477 = vadd.f32 %v405, %v440
  %v478 = vadd.f32 %v406, %v445
  %v479 = vadd.f32 %v407, %v445
  %v480 = vadd.f32 %v408, %v445
  %v481 = vadd.f32 %v409, %v445
  %v482 = vadd.f32 %v410, %v450
  %v483 = vadd.f32 %v411, %v450
  %v484 = vadd.f32 %v412, %v450
  %v485 = vadd.f32 %v413, %v450
  %v486 = vadd.f32 %v414, %v455
  %v487 = vadd.f32 %v415, %v455
  %v488 = vadd.f32 %v416, %v455
  %v489 = vadd.f32 %v417, %v455
  %v490 = vadd.f32 %v418, %v460
  %v491 = vadd.f32 %v419, %v460
  %v492 = vadd.f32 %v420, %v460
  %v493 = vadd.f32 %v421, %v460
  %v494 = vmax.f32 %v462, 0.0
  %v495 = vmax.f32 %v463, 0.0
  %v496 = vmax.f32 %v464, 0.0
  %v497 = vmax.f32 %v465, 0.0
  %v498 = vmax.f32 %v466, 0.0
  %v499 = vmax.f32 %v467, 0.0
  %v500 = vmax.f32 %v468, 0.0
  %v501 = vmax.f32 %v469, 0.0
  %v502 = vmax.f32 %v470, 0.0
  %v503 = vmax.f32 %v471, 0.0
  %v504 = vmax.f32 %v472, 0.0
  %v505 = vmax.f32 %v473, 0.0
  %v506 = vmax.f32 %v474, 0.0
  %v507 = vmax.f32 %v475, 0.0
  %v508 = vmax.f32 %v476, 0.0
  %v509 = vmax.f32 %v477, 0.0
  %v510 = vmax.f32 %v478, 0.0
  %v511 = vmax.f32 %v479, 0.0
  %v512 = vmax.f32 %v480, 0.0
  %v513 = vmax.f32 %v481, 0.0
  %v514 = vmax.f32 %v482, 0.0
  %v515 = vmax.f32 %v483, 0.0
  %v516 = vmax.f32 %v484, 0.0
  %v517 = vmax.f32 %v485, 0.0
  %v518 = vmax.f32 %v486, 0.0
  %v519 = vmax.f32 %v487, 0.0
  %v520 = vmax.f32 %v488, 0.0
  %v521 = vmax.f32 %v489, 0.0
  %v522 = vmax.f32 %v490, 0.0
  %v523 = vmax.f32 %v491, 0.0
  %v524 = vmax.f32 %v492, 0.0
  %v525 = vmax.f32 %v493, 0.0
  %v526 = vsel %vm37, 1, 0
  %v527 = vlaneseq
  %v528 = vshrl.u32 %v527, 7
  %v529 = vsub.s32 0, %v528
  %v530 = vrot.slane %v526, %v529
  %v531 = vlaneseq
  %v532 = vshrl.u32 %v531, 7
  %v533 = vsub.s32 1, %v532
  %v534 = vrot.slane %v526, %v533
  %v535 = vlaneseq
  %v536 = vshrl.u32 %v535, 7
  %v537 = vsub.s32 2, %v536
  %v538 = vrot.slane %v526, %v537
  %v539 = vlaneseq
  %v540 = vshrl.u32 %v539, 7
  %v541 = vsub.s32 3, %v540
  %v542 = vrot.slane %v526, %v541
  %vm543 = vcmp.eq.s32.totalorder %v530, 1
  %vm544 = vcmp.eq.s32.totalorder %v534, 1
  %vm545 = vcmp.eq.s32.totalorder %v538, 1
  %vm546 = vcmp.eq.s32.totalorder %v542, 1
  %548 = vset.pattern.permute.xlu0 0
  %549 = vperm.xlu0 %548, %v28
  %v550 = vpop.permute.xlu0 %549
  %553 = vset.pattern.permute.xlu0 0
  %554 = vperm.xlu0 %553, %v29
  %v555 = vpop.permute.xlu0 %554
  %558 = vset.pattern.permute.xlu0 0
  %559 = vperm.xlu0 %558, %v30
  %v560 = vpop.permute.xlu0 %559
  %563 = vset.pattern.permute.xlu0 0
  %564 = vperm.xlu0 %563, %v31
  %v565 = vpop.permute.xlu0 %564
  %568 = vset.pattern.permute.xlu0 0
  %569 = vperm.xlu0 %568, %v32
  %v570 = vpop.permute.xlu0 %569
  %573 = vset.pattern.permute.xlu0 0
  %574 = vperm.xlu0 %573, %v33
  %v575 = vpop.permute.xlu0 %574
  %578 = vset.pattern.permute.xlu0 0
  %579 = vperm.xlu0 %578, %v34
  %v580 = vpop.permute.xlu0 %579
  %583 = vset.pattern.permute.xlu0 0
  %584 = vperm.xlu0 %583, %v35
  %v585 = vpop.permute.xlu0 %584
  %v587 = vsel %vm543, %v550, %v494
  %v588 = vsel %vm544, %v550, %v495
  %v589 = vsel %vm545, %v550, %v496
  %v590 = vsel %vm546, %v550, %v497
  %v591 = vsel %vm543, %v555, %v498
  %v592 = vsel %vm544, %v555, %v499
  %v593 = vsel %vm545, %v555, %v500
  %v594 = vsel %vm546, %v555, %v501
  %v595 = vsel %vm543, %v560, %v502
  %v596 = vsel %vm544, %v560, %v503
  %v597 = vsel %vm545, %v560, %v504
  %v598 = vsel %vm546, %v560, %v505
  %v599 = vsel %vm543, %v565, %v506
  %v600 = vsel %vm544, %v565, %v507
  %v601 = vsel %vm545, %v565, %v508
  %v602 = vsel %vm546, %v565, %v509
  %v603 = vsel %vm543, %v570, %v510
  %v604 = vsel %vm544, %v570, %v511
  %v605 = vsel %vm545, %v570, %v512
  %v606 = vsel %vm546, %v570, %v513
  %v607 = vsel %vm543, %v575, %v514
  %v608 = vsel %vm544, %v575, %v515
  %v609 = vsel %vm545, %v575, %v516
  %v610 = vsel %vm546, %v575, %v517
  %v611 = vsel %vm543, %v580, %v518
  %v612 = vsel %vm544, %v580, %v519
  %v613 = vsel %vm545, %v580, %v520
  %v614 = vsel %vm546, %v580, %v521
  %v615 = vsel %vm543, %v585, %v522
  %v616 = vsel %vm544, %v585, %v523
  %v617 = vsel %vm545, %v585, %v524
  %v618 = vsel %vm546, %v585, %v525
  %619 = vst [vmem:[%s5] sm:$0xff] %v587
  %620 = vst [vmem:[%s5 + $0x8] sm:$0xff] %v588
  %621 = vst [vmem:[%s5 + $0x10] sm:$0xff] %v589
  %vm622 = vcmask 130048
  %623 = vst.msk [vmem:[%s5 + $0x18] sm:$0xff] %vm622, %v590
  %624 = vst [vmem:[%s5 + $0x20] sm:$0xff] %v591
  %625 = vst [vmem:[%s5 + $0x28] sm:$0xff] %v592
  %626 = vst [vmem:[%s5 + $0x30] sm:$0xff] %v593
  %627 = vst.msk [vmem:[%s5 + $0x38] sm:$0xff] %vm622, %v594
  %628 = vst [vmem:[%s5 + $0x40] sm:$0xff] %v595
  %629 = vst [vmem:[%s5 + $0x48] sm:$0xff] %v596
  %630 = vst [vmem:[%s5 + $0x50] sm:$0xff] %v597
  %631 = vst.msk [vmem:[%s5 + $0x58] sm:$0xff] %vm622, %v598
  %632 = vst [vmem:[%s5 + $0x60] sm:$0xff] %v599
  %633 = vst [vmem:[%s5 + $0x68] sm:$0xff] %v600
  %634 = vst [vmem:[%s5 + $0x70] sm:$0xff] %v601
  %635 = vst.msk [vmem:[%s5 + $0x78] sm:$0xff] %vm622, %v602
  %636 = vst [vmem:[%s5 + $0x80] sm:$0xff] %v603
  %637 = vst [vmem:[%s5 + $0x88] sm:$0xff] %v604
  %638 = vst [vmem:[%s5 + $0x90] sm:$0xff] %v605
  %639 = vst.msk [vmem:[%s5 + $0x98] sm:$0xff] %vm622, %v606
  %640 = vst [vmem:[%s5 + $0xa0] sm:$0xff] %v607
  %641 = vst [vmem:[%s5 + $0xa8] sm:$0xff] %v608
  %642 = vst [vmem:[%s5 + $0xb0] sm:$0xff] %v609
  %643 = vst.msk [vmem:[%s5 + $0xb8] sm:$0xff] %vm622, %v610
  %644 = vst [vmem:[%s5 + $0xc0] sm:$0xff] %v611
  %645 = vst [vmem:[%s5 + $0xc8] sm:$0xff] %v612
  %646 = vst [vmem:[%s5 + $0xd0] sm:$0xff] %v613
  %647 = vst.msk [vmem:[%s5 + $0xd8] sm:$0xff] %vm622, %v614
  %648 = vst [vmem:[%s5 + $0xe0] sm:$0xff] %v615
  %649 = vst [vmem:[%s5 + $0xe8] sm:$0xff] %v616
  %650 = vst [vmem:[%s5 + $0xf0] sm:$0xff] %v617
  %651 = vst.msk [vmem:[%s5 + $0xf8] sm:$0xff] %vm622, %v618
  %s652 = scalar_lea.vmem %s0, 16
  %v653 = vld [vmem:[%s652] sm:$0x77]
  %v654 = vld [vmem:[%s652 + $0x8] sm:$0x77]
  %v657 = vlaneseq
  %v658 = vshrl.u32 %v657, 7
  %v659 = vsub.s32 0, %v658
  %v660 = vrot.slane %v653, %v659
  %v661 = vlaneseq
  %v662 = vshrl.u32 %v661, 7
  %v663 = vsub.s32 4, %v662
  %v664 = vrot.slane %v653, %v663
  %v665 = vlaneseq
  %v666 = vshrl.u32 %v665, 7
  %v667 = vsub.s32 0, %v666
  %v668 = vrot.slane %v654, %v667
  %v669 = vlaneseq
  %v670 = vshrl.u32 %v669, 7
  %v671 = vsub.s32 4, %v670
  %v672 = vrot.slane %v654, %v671
  %v677 = vlaneseq
  %v678 = vshrl.u32 %v677, 7
  %v679 = vsub.s32 0, %v678
  %v680 = vrot.slane %v660, %v679
  %v681 = vlaneseq
  %v682 = vshrl.u32 %v681, 7
  %v683 = vsub.s32 0, %v682
  %v684 = vrot.slane %v664, %v683
  %v685 = vlaneseq
  %v686 = vshrl.u32 %v685, 7
  %v687 = vsub.s32 0, %v686
  %v688 = vrot.slane %v668, %v687
  %v689 = vlaneseq
  %v690 = vshrl.u32 %v689, 7
  %v691 = vsub.s32 0, %v690
  %v692 = vrot.slane %v672, %v691
  %v693 = vmul.f32 %v51, %v680
  %v694 = vmul.f32 %v51, %v684
  %v695 = vmul.f32 %v51, %v688
  %v696 = vmul.f32 %v51, %v692
  %v697 = vmul.f32 %v56, %v680
  %v698 = vmul.f32 %v56, %v684
  %v699 = vmul.f32 %v56, %v688
  %v700 = vmul.f32 %v56, %v692
  %v701 = vmul.f32 %v61, %v680
  %v702 = vmul.f32 %v61, %v684
  %v703 = vmul.f32 %v61, %v688
  %v704 = vmul.f32 %v61, %v692
  %v705 = vmul.f32 %v66, %v680
  %v706 = vmul.f32 %v66, %v684
  %v707 = vmul.f32 %v66, %v688
  %v708 = vmul.f32 %v66, %v692
  %v709 = vmul.f32 %v71, %v680
  %v710 = vmul.f32 %v71, %v684
  %v711 = vmul.f32 %v71, %v688
  %v712 = vmul.f32 %v71, %v692
  %v713 = vmul.f32 %v76, %v680
  %v714 = vmul.f32 %v76, %v684
  %v715 = vmul.f32 %v76, %v688
  %v716 = vmul.f32 %v76, %v692
  %v717 = vmul.f32 %v81, %v680
  %v718 = vmul.f32 %v81, %v684
  %v719 = vmul.f32 %v81, %v688
  %v720 = vmul.f32 %v81, %v692
  %v721 = vmul.f32 %v86, %v680
  %v722 = vmul.f32 %v86, %v684
  %v723 = vmul.f32 %v86, %v688
  %v724 = vmul.f32 %v86, %v692
  %v725 = vlaneseq
  %v726 = vshrl.u32 %v725, 7
  %v727 = vsub.s32 1, %v726
  %v728 = vrot.slane %v653, %v727
  %v729 = vlaneseq
  %v730 = vshrl.u32 %v729, 7
  %v731 = vsub.s32 5, %v730
  %v732 = vrot.slane %v653, %v731
  %v733 = vlaneseq
  %v734 = vshrl.u32 %v733, 7
  %v735 = vsub.s32 1, %v734
  %v736 = vrot.slane %v654, %v735
  %v737 = vlaneseq
  %v738 = vshrl.u32 %v737, 7
  %v739 = vsub.s32 5, %v738
  %v740 = vrot.slane %v654, %v739
  %v745 = vlaneseq
  %v746 = vshrl.u32 %v745, 7
  %v747 = vsub.s32 1, %v746
  %v748 = vrot.slane %v728, %v747
  %v749 = vlaneseq
  %v750 = vshrl.u32 %v749, 7
  %v751 = vsub.s32 1, %v750
  %v752 = vrot.slane %v732, %v751
  %v753 = vlaneseq
  %v754 = vshrl.u32 %v753, 7
  %v755 = vsub.s32 1, %v754
  %v756 = vrot.slane %v736, %v755
  %v757 = vlaneseq
  %v758 = vshrl.u32 %v757, 7
  %v759 = vsub.s32 1, %v758
  %v760 = vrot.slane %v740, %v759
  %v761 = vmul.f32 %v160, %v748
  %v762 = vmul.f32 %v160, %v752
  %v763 = vmul.f32 %v160, %v756
  %v764 = vmul.f32 %v160, %v760
  %v765 = vmul.f32 %v164, %v748
  %v766 = vmul.f32 %v164, %v752
  %v767 = vmul.f32 %v164, %v756
  %v768 = vmul.f32 %v164, %v760
  %v769 = vmul.f32 %v168, %v748
  %v770 = vmul.f32 %v168, %v752
  %v771 = vmul.f32 %v168, %v756
  %v772 = vmul.f32 %v168, %v760
  %v773 = vmul.f32 %v172, %v748
  %v774 = vmul.f32 %v172, %v752
  %v775 = vmul.f32 %v172, %v756
  %v776 = vmul.f32 %v172, %v760
  %v777 = vmul.f32 %v176, %v748
  %v778 = vmul.f32 %v176, %v752
  %v779 = vmul.f32 %v176, %v756
  %v780 = vmul.f32 %v176, %v760
  %v781 = vmul.f32 %v180, %v748
  %v782 = vmul.f32 %v180, %v752
  %v783 = vmul.f32 %v180, %v756
  %v784 = vmul.f32 %v180, %v760
  %v785 = vmul.f32 %v184, %v748
  %v786 = vmul.f32 %v184, %v752
  %v787 = vmul.f32 %v184, %v756
  %v788 = vmul.f32 %v184, %v760
  %v789 = vmul.f32 %v188, %v748
  %v790 = vmul.f32 %v188, %v752
  %v791 = vmul.f32 %v188, %v756
  %v792 = vmul.f32 %v188, %v760
  %v793 = vadd.f32 %v693, %v761
  %v794 = vadd.f32 %v694, %v762
  %v795 = vadd.f32 %v695, %v763
  %v796 = vadd.f32 %v696, %v764
  %v797 = vadd.f32 %v697, %v765
  %v798 = vadd.f32 %v698, %v766
  %v799 = vadd.f32 %v699, %v767
  %v800 = vadd.f32 %v700, %v768
  %v801 = vadd.f32 %v701, %v769
  %v802 = vadd.f32 %v702, %v770
  %v803 = vadd.f32 %v703, %v771
  %v804 = vadd.f32 %v704, %v772
  %v805 = vadd.f32 %v705, %v773
  %v806 = vadd.f32 %v706, %v774
  %v807 = vadd.f32 %v707, %v775
  %v808 = vadd.f32 %v708, %v776
  %v809 = vadd.f32 %v709, %v777
  %v810 = vadd.f32 %v710, %v778
  %v811 = vadd.f32 %v711, %v779
  %v812 = vadd.f32 %v712, %v780
  %v813 = vadd.f32 %v713, %v781
  %v814 = vadd.f32 %v714, %v782
  %v815 = vadd.f32 %v715, %v783
  %v816 = vadd.f32 %v716, %v784
  %v817 = vadd.f32 %v717, %v785
  %v818 = vadd.f32 %v718, %v786
  %v819 = vadd.f32 %v719, %v787
  %v820 = vadd.f32 %v720, %v788
  %v821 = vadd.f32 %v721, %v789
  %v822 = vadd.f32 %v722, %v790
  %v823 = vadd.f32 %v723, %v791
  %v824 = vadd.f32 %v724, %v792
  %v825 = vlaneseq
  %v826 = vshrl.u32 %v825, 7
  %v827 = vsub.s32 2, %v826
  %v828 = vrot.slane %v653, %v827
  %v829 = vlaneseq
  %v830 = vshrl.u32 %v829, 7
  %v831 = vsub.s32 6, %v830
  %v832 = vrot.slane %v653, %v831
  %v833 = vlaneseq
  %v834 = vshrl.u32 %v833, 7
  %v835 = vsub.s32 2, %v834
  %v836 = vrot.slane %v654, %v835
  %v837 = vlaneseq
  %v838 = vshrl.u32 %v837, 7
  %v839 = vsub.s32 6, %v838
  %v840 = vrot.slane %v654, %v839
  %v845 = vlaneseq
  %v846 = vshrl.u32 %v845, 7
  %v847 = vsub.s32 2, %v846
  %v848 = vrot.slane %v828, %v847
  %v849 = vlaneseq
  %v850 = vshrl.u32 %v849, 7
  %v851 = vsub.s32 2, %v850
  %v852 = vrot.slane %v832, %v851
  %v853 = vlaneseq
  %v854 = vshrl.u32 %v853, 7
  %v855 = vsub.s32 2, %v854
  %v856 = vrot.slane %v836, %v855
  %v857 = vlaneseq
  %v858 = vshrl.u32 %v857, 7
  %v859 = vsub.s32 2, %v858
  %v860 = vrot.slane %v840, %v859
  %v861 = vmul.f32 %v292, %v848
  %v862 = vmul.f32 %v292, %v852
  %v863 = vmul.f32 %v292, %v856
  %v864 = vmul.f32 %v292, %v860
  %v865 = vmul.f32 %v296, %v848
  %v866 = vmul.f32 %v296, %v852
  %v867 = vmul.f32 %v296, %v856
  %v868 = vmul.f32 %v296, %v860
  %v869 = vmul.f32 %v300, %v848
  %v870 = vmul.f32 %v300, %v852
  %v871 = vmul.f32 %v300, %v856
  %v872 = vmul.f32 %v300, %v860
  %v873 = vmul.f32 %v304, %v848
  %v874 = vmul.f32 %v304, %v852
  %v875 = vmul.f32 %v304, %v856
  %v876 = vmul.f32 %v304, %v860
  %v877 = vmul.f32 %v308, %v848
  %v878 = vmul.f32 %v308, %v852
  %v879 = vmul.f32 %v308, %v856
  %v880 = vmul.f32 %v308, %v860
  %v881 = vmul.f32 %v312, %v848
  %v882 = vmul.f32 %v312, %v852
  %v883 = vmul.f32 %v312, %v856
  %v884 = vmul.f32 %v312, %v860
  %v885 = vmul.f32 %v316, %v848
  %v886 = vmul.f32 %v316, %v852
  %v887 = vmul.f32 %v316, %v856
  %v888 = vmul.f32 %v316, %v860
  %v889 = vmul.f32 %v320, %v848
  %v890 = vmul.f32 %v320, %v852
  %v891 = vmul.f32 %v320, %v856
  %v892 = vmul.f32 %v320, %v860
  %v893 = vadd.f32 %v793, %v861
  %v894 = vadd.f32 %v794, %v862
  %v895 = vadd.f32 %v795, %v863
  %v896 = vadd.f32 %v796, %v864
  %v897 = vadd.f32 %v797, %v865
  %v898 = vadd.f32 %v798, %v866
  %v899 = vadd.f32 %v799, %v867
  %v900 = vadd.f32 %v800, %v868
  %v901 = vadd.f32 %v801, %v869
  %v902 = vadd.f32 %v802, %v870
  %v903 = vadd.f32 %v803, %v871
  %v904 = vadd.f32 %v804, %v872
  %v905 = vadd.f32 %v805, %v873
  %v906 = vadd.f32 %v806, %v874
  %v907 = vadd.f32 %v807, %v875
  %v908 = vadd.f32 %v808, %v876
  %v909 = vadd.f32 %v809, %v877
  %v910 = vadd.f32 %v810, %v878
  %v911 = vadd.f32 %v811, %v879
  %v912 = vadd.f32 %v812, %v880
  %v913 = vadd.f32 %v813, %v881
  %v914 = vadd.f32 %v814, %v882
  %v915 = vadd.f32 %v815, %v883
  %v916 = vadd.f32 %v816, %v884
  %v917 = vadd.f32 %v817, %v885
  %v918 = vadd.f32 %v818, %v886
  %v919 = vadd.f32 %v819, %v887
  %v920 = vadd.f32 %v820, %v888
  %v921 = vadd.f32 %v821, %v889
  %v922 = vadd.f32 %v822, %v890
  %v923 = vadd.f32 %v823, %v891
  %v924 = vadd.f32 %v824, %v892
  %v925 = vadd.f32 %v893, %v425
  %v926 = vadd.f32 %v894, %v425
  %v927 = vadd.f32 %v895, %v425
  %v928 = vadd.f32 %v896, %v425
  %v929 = vadd.f32 %v897, %v430
  %v930 = vadd.f32 %v898, %v430
  %v931 = vadd.f32 %v899, %v430
  %v932 = vadd.f32 %v900, %v430
  %v933 = vadd.f32 %v901, %v435
  %v934 = vadd.f32 %v902, %v435
  %v935 = vadd.f32 %v903, %v435
  %v936 = vadd.f32 %v904, %v435
  %v937 = vadd.f32 %v905, %v440
  %v938 = vadd.f32 %v906, %v440
  %v939 = vadd.f32 %v907, %v440
  %v940 = vadd.f32 %v908, %v440
  %v941 = vadd.f32 %v909, %v445
  %v942 = vadd.f32 %v910, %v445
  %v943 = vadd.f32 %v911, %v445
  %v944 = vadd.f32 %v912, %v445
  %v945 = vadd.f32 %v913, %v450
  %v946 = vadd.f32 %v914, %v450
  %v947 = vadd.f32 %v915, %v450
  %v948 = vadd.f32 %v916, %v450
  %v949 = vadd.f32 %v917, %v455
  %v950 = vadd.f32 %v918, %v455
  %v951 = vadd.f32 %v919, %v455
  %v952 = vadd.f32 %v920, %v455
  %v953 = vadd.f32 %v921, %v460
  %v954 = vadd.f32 %v922, %v460
  %v955 = vadd.f32 %v923, %v460
  %v956 = vadd.f32 %v924, %v460
  %v957 = vmax.f32 %v925, 0.0
  %v958 = vmax.f32 %v926, 0.0
  %v959 = vmax.f32 %v927, 0.0
  %v960 = vmax.f32 %v928, 0.0
  %v961 = vmax.f32 %v929, 0.0
  %v962 = vmax.f32 %v930, 0.0
  %v963 = vmax.f32 %v931, 0.0
  %v964 = vmax.f32 %v932, 0.0
  %v965 = vmax.f32 %v933, 0.0
  %v966 = vmax.f32 %v934, 0.0
  %v967 = vmax.f32 %v935, 0.0
  %v968 = vmax.f32 %v936, 0.0
  %v969 = vmax.f32 %v937, 0.0
  %v970 = vmax.f32 %v938, 0.0
  %v971 = vmax.f32 %v939, 0.0
  %v972 = vmax.f32 %v940, 0.0
  %v973 = vmax.f32 %v941, 0.0
  %v974 = vmax.f32 %v942, 0.0
  %v975 = vmax.f32 %v943, 0.0
  %v976 = vmax.f32 %v944, 0.0
  %v977 = vmax.f32 %v945, 0.0
  %v978 = vmax.f32 %v946, 0.0
  %v979 = vmax.f32 %v947, 0.0
  %v980 = vmax.f32 %v948, 0.0
  %v981 = vmax.f32 %v949, 0.0
  %v982 = vmax.f32 %v950, 0.0
  %v983 = vmax.f32 %v951, 0.0
  %v984 = vmax.f32 %v952, 0.0
  %v985 = vmax.f32 %v953, 0.0
  %v986 = vmax.f32 %v954, 0.0
  %v987 = vmax.f32 %v955, 0.0
  %v988 = vmax.f32 %v956, 0.0
  %v989 = vsel %vm543, %v550, %v957
  %v990 = vsel %vm544, %v550, %v958
  %v991 = vsel %vm545, %v550, %v959
  %v992 = vsel %vm546, %v550, %v960
  %v993 = vsel %vm543, %v555, %v961
  %v994 = vsel %vm544, %v555, %v962
  %v995 = vsel %vm545, %v555, %v963
  %v996 = vsel %vm546, %v555, %v964
  %v997 = vsel %vm543, %v560, %v965
  %v998 = vsel %vm544, %v560, %v966
  %v999 = vsel %vm545, %v560, %v967
  %v1000 = vsel %vm546, %v560, %v968
  %v1001 = vsel %vm543, %v565, %v969
  %v1002 = vsel %vm544, %v565, %v970
  %v1003 = vsel %vm545, %v565, %v971
  %v1004 = vsel %vm546, %v565, %v972
  %v1005 = vsel %vm543, %v570, %v973
  %v1006 = vsel %vm544, %v570, %v974
  %v1007 = vsel %vm545, %v570, %v975
  %v1008 = vsel %vm546, %v570, %v976
  %v1009 = vsel %vm543, %v575, %v977
  %v1010 = vsel %vm544, %v575, %v978
  %v1011 = vsel %vm545, %v575, %v979
  %v1012 = vsel %vm546, %v575, %v980
  %v1013 = vsel %vm543, %v580, %v981
  %v1014 = vsel %vm544, %v580, %v982
  %v1015 = vsel %vm545, %v580, %v983
  %v1016 = vsel %vm546, %v580, %v984
  %v1017 = vsel %vm543, %v585, %v985
  %v1018 = vsel %vm544, %v585, %v986
  %v1019 = vsel %vm545, %v585, %v987
  %v1020 = vsel %vm546, %v585, %v988
  %s1021 = scalar_lea.vmem %s5, 256
  %1022 = vst [vmem:[%s1021] sm:$0xff] %v989
  %1023 = vst [vmem:[%s1021 + $0x8] sm:$0xff] %v990
  %1024 = vst [vmem:[%s1021 + $0x10] sm:$0xff] %v991
  %1025 = vst.msk [vmem:[%s1021 + $0x18] sm:$0xff] %vm622, %v992
  %1026 = vst [vmem:[%s1021 + $0x20] sm:$0xff] %v993
  %1027 = vst [vmem:[%s1021 + $0x28] sm:$0xff] %v994
  %1028 = vst [vmem:[%s1021 + $0x30] sm:$0xff] %v995
  %1029 = vst.msk [vmem:[%s1021 + $0x38] sm:$0xff] %vm622, %v996
  %1030 = vst [vmem:[%s1021 + $0x40] sm:$0xff] %v997
  %1031 = vst [vmem:[%s1021 + $0x48] sm:$0xff] %v998
  %1032 = vst [vmem:[%s1021 + $0x50] sm:$0xff] %v999
  %1033 = vst.msk [vmem:[%s1021 + $0x58] sm:$0xff] %vm622, %v1000
  %1034 = vst [vmem:[%s1021 + $0x60] sm:$0xff] %v1001
  %1035 = vst [vmem:[%s1021 + $0x68] sm:$0xff] %v1002
  %1036 = vst [vmem:[%s1021 + $0x70] sm:$0xff] %v1003
  %1037 = vst.msk [vmem:[%s1021 + $0x78] sm:$0xff] %vm622, %v1004
  %1038 = vst [vmem:[%s1021 + $0x80] sm:$0xff] %v1005
  %1039 = vst [vmem:[%s1021 + $0x88] sm:$0xff] %v1006
  %1040 = vst [vmem:[%s1021 + $0x90] sm:$0xff] %v1007
  %1041 = vst.msk [vmem:[%s1021 + $0x98] sm:$0xff] %vm622, %v1008
  %1042 = vst [vmem:[%s1021 + $0xa0] sm:$0xff] %v1009
  %1043 = vst [vmem:[%s1021 + $0xa8] sm:$0xff] %v1010
  %1044 = vst [vmem:[%s1021 + $0xb0] sm:$0xff] %v1011
  %1045 = vst.msk [vmem:[%s1021 + $0xb8] sm:$0xff] %vm622, %v1012
  %1046 = vst [vmem:[%s1021 + $0xc0] sm:$0xff] %v1013
  %1047 = vst [vmem:[%s1021 + $0xc8] sm:$0xff] %v1014
  %1048 = vst [vmem:[%s1021 + $0xd0] sm:$0xff] %v1015
  %1049 = vst.msk [vmem:[%s1021 + $0xd8] sm:$0xff] %vm622, %v1016
  %1050 = vst [vmem:[%s1021 + $0xe0] sm:$0xff] %v1017
  %1051 = vst [vmem:[%s1021 + $0xe8] sm:$0xff] %v1018
  %1052 = vst [vmem:[%s1021 + $0xf0] sm:$0xff] %v1019
  %1053 = vst.msk [vmem:[%s1021 + $0xf8] sm:$0xff] %vm622, %v1020
  // Predicated region
  $region22: #{model_forward.1} parent=0 // pred_check
    _
  $region23: #{model_forward.1} parent=0 // pred_check_branch
    %1055 = sbr.rel (0) target = $region25
  $region24: #{model_forward.1} parent=0 // pred_region
    _
  $region25: #{model_forward.1} parent=0 // pred_fallthru
    _
  // Predicated region
  $region26: #{model_forward.1} parent=0 // pred_check
    _
  $region27: #{model_forward.1} parent=0 // pred_check_branch
    %1057 = sbr.rel (0) target = $region29
  $region28: #{model_forward.1} parent=0 // pred_region
    _
  $region29: #{model_forward.1} parent=0 // pred_fallthru
    _

</llo_original>
